<compile_context>
chip_gen: v5e
topology: v5e:2x2
jax: 0.10.0
libtpu: 0.0.40
codegen_flags: <defaults>
</compile_context>

<pallas_src>
import numpy as np
import jax
import jax.numpy as jnp
from jax.experimental import pallas as pl
from jax.experimental.pallas import tpu as pltpu

LANE = 128
TM_MAX = 1024   # largest batch tile per grid step (review: 512-2048, VMEM-cheap here)


def _round_up(x, m):
    return (x + m - 1) // m * m


# ----------------------------------------------------------------------------
# Kernel: fused MLP forward  (relu(x @ W1 + b1) @ W2 + b2), lane-packed output
# ----------------------------------------------------------------------------
def mlp_kernel(x_ref, w1_ref, b1_ref, w2_ref, b2_ref, out_ref):
    # fc1: MXU bf16 inputs, f32 accumulation; bias + ReLU in f32 on the VPU.
    x = x_ref[...].astype(jnp.bfloat16)                                   # (TM, IN)
    h = jnp.dot(x, w1_ref[...], preferred_element_type=jnp.float32)       # (TM, HID_P)
    h = jnp.maximum(h + b1_ref[...], 0.0)
    # TODO(synk): dropout(p=0.3) skipped (eval-mode identity).

    # fc2: W2 is lane-padded to 128 columns; only column 0 is the real output.
    y = jnp.dot(h.astype(jnp.bfloat16), w2_ref[...],
                preferred_element_type=jnp.float32)                       # (TM, 128)

    # Lane-pack the single valid output column so the HBM write is
    # (TM/128, 128) instead of (TM, 128): batched 128x128 block transpose on
    # the otherwise-idle XLU, then keep sublane 0 of each transposed block.
    tm = y.shape[0]
    yb = y.reshape(tm // LANE, LANE, LANE)
    ybt = jnp.swapaxes(yb, 1, 2)                                          # XLU vxpose
    packed = ybt[:, 0, :] + b2_ref[...]                                   # (TM/128, 128)
    out_ref[...] = packed[None, :, :]                                     # (1, TM/128, 128)


# ----------------------------------------------------------------------------
# Parameters (PyTorch nn.Linear-style init) and one-time host-side padding
# ----------------------------------------------------------------------------
def init_mlp_params(key, input_size, hidden_size):
    k1, k2, k3, k4 = jax.random.split(key, 4)
    lim1 = 1.0 / np.sqrt(input_size)
    lim2 = 1.0 / np.sqrt(hidden_size)
    return dict(
        w1=jax.random.uniform(k1, (input_size, hidden_size), jnp.float32, -lim1, lim1),
        b1=jax.random.uniform(k2, (hidden_size,), jnp.float32, -lim1, lim1),
        w2=jax.random.uniform(k3, (hidden_size, 1), jnp.float32, -lim2, lim2),
        b2=jax.random.uniform(k4, (1,), jnp.float32, -lim2, lim2),
    )


def prepare_padded_params(params):
    """One-time padding to lane-dense shapes + bf16 cast for the MXU."""
    w1 = np.asarray(params["w1"], np.float32)
    b1 = np.asarray(params["b1"], np.float32)
    w2 = np.asarray(params["w2"], np.float32)
    b2 = np.asarray(params["b2"], np.float32)
    in_size, hid = w1.shape

    # Hidden padding: 128 minimum; multiples of 256 once hid > 128 so the
    # 2x256^2 MXUs on v6e/v7x see full passes (also a 128-multiple -> v5e ok).
    hid_p = _round_up(hid, LANE) if hid <= LANE else _round_up(hid, 2 * LANE)

    w1_p = np.zeros((in_size, hid_p), np.float32); w1_p[:, :hid] = w1
    b1_p = np.zeros((1, hid_p), np.float32);       b1_p[0, :hid] = b1
    w2_p = np.zeros((hid_p, LANE), np.float32);    w2_p[:hid, 0] = w2[:, 0]
    # Every lane of the packed output is a real prediction -> broadcast b2.
    b2_p = np.full((1, LANE), b2[0], np.float32)

    return dict(
        w1=jnp.asarray(w1_p, jnp.bfloat16),
        b1=jnp.asarray(b1_p, jnp.float32),
        w2=jnp.asarray(w2_p, jnp.bfloat16),
        b2=jnp.asarray(b2_p, jnp.float32),
    )


# ----------------------------------------------------------------------------
# Forward wrapper
# ----------------------------------------------------------------------------
def mlp_forward(padded, x):
    B, in_size = x.shape
    hid_p = padded["w1"].shape[1]

    # Batch tiling: lane-packing needs row blocks that are multiples of 128.
    b128 = _round_up(B, LANE)
    grid_n = pl.cdiv(b128, TM_MAX)
    if grid_n == 1 and b128 >= 2 * LANE:
        grid_n = 2                      # keep both v7x TensorCores busy at mid sizes
    if grid_n > 1:
        grid_n = _round_up(grid_n, 2)   # even grid -> balanced megacore split on v7x
    tm = _round_up(pl.cdiv(b128, grid_n), LANE)
    b_pad = tm * grid_n
    if b_pad != B:
        # Needed so every row block is full; pads <= tm rows, negligible vs. B.
        x = jnp.pad(x, ((0, b_pad - B), (0, 0)))

    flops = 2 * b_pad * hid_p * (in_size + LANE)
    bytes_accessed = (x.size * x.dtype.itemsize      # input read
                      + padded["w1"].size * 2 + padded["w2"].size * 2
                      + (hid_p + LANE) * 4           # biases
                      + b_pad * 4)                   # lane-packed f32 output

    out = pl.pallas_call(
        mlp_kernel,
        out_shape=jax.ShapeDtypeStruct((grid_n, tm // LANE, LANE), jnp.float32),
        grid_spec=pltpu.PrefetchScalarGridSpec(
            num_scalar_prefetch=0,
            grid=(grid_n,),
            in_specs=[
                pl.BlockSpec((tm, in_size), lambda i: (i, 0)),
                # Weights/biases: constant index_map -> resident in VMEM.
                # TODO(synk): for very large layers on v7x (64 MiB VMEM), single-
                # buffer these (pipeline_mode=pl.Buffered(1)) or tile hidden dim.
                pl.BlockSpec((in_size, hid_p), lambda i: (0, 0)),
                pl.BlockSpec((1, hid_p), lambda i: (0, 0)),
                pl.BlockSpec((hid_p, LANE), lambda i: (0, 0)),
                pl.BlockSpec((1, LANE), lambda i: (0, 0)),
            ],
            out_specs=pl.BlockSpec((1, tm // LANE, LANE), lambda i: (i, 0, 0)),
        ),
        compiler_params=pltpu.CompilerParams(
            dimension_semantics=("parallel",),
            vmem_limit_bytes=32 * 1024 * 1024),
        cost_estimate=pl.CostEstimate(
            flops=flops, transcendentals=0, bytes_accessed=bytes_accessed),
    )(x, padded["w1"], padded["b1"], padded["w2"], padded["b2"])

    # Packed layout: out[i, m, j] is the prediction for batch row i*tm + m*128 + j.
    return out.reshape(-1)[:B, None]


# ----------------------------------------------------------------------------
if __name__ == "__main__":
    input_size = 16
    hidden_size = 32
    batch = 16

    key = jax.random.PRNGKey(0)
    k_param, k_x = jax.random.split(key)
    params = init_mlp_params(k_param, input_size, hidden_size)
    padded = prepare_padded_params(params)

    x = jax.random.normal(k_x, (batch, input_size), jnp.float32)

    y = jax.jit(mlp_forward)(padded, x)
    jax.block_until_ready(y)

    # Pure-JAX reference using the same bf16-MXU / f32-accumulate policy.
    h_ref = jnp.maximum(
        jnp.dot(x.astype(jnp.bfloat16), params["w1"].astype(jnp.bfloat16),
                preferred_element_type=jnp.float32) + params["b1"][None, :],
        0.0)
    y_ref = jnp.dot(h_ref.astype(jnp.bfloat16), params["w2"].astype(jnp.bfloat16),
                    preferred_element_type=jnp.float32) + params["b2"][None, :]

    assert y.shape == (batch, 1)
    err = float(jnp.max(jnp.abs(y - y_ref)))
    assert err < 1e-2, f"max abs err {err}"
    print("KERNEL_OK")
</pallas_src>

<mosaic_0001>
module attributes {stable_mosaic.version = 11 : i64} {
  func.func @mlp_kernel(%arg0: i32, %arg1: memref<128x16xf32, #tpu.memory_space<vmem>>, %arg2: memref<16x128xbf16, #tpu.memory_space<vmem>>, %arg3: memref<1x128xf32, #tpu.memory_space<vmem>>, %arg4: memref<128x128xbf16, #tpu.memory_space<vmem>>, %arg5: memref<1x128xf32, #tpu.memory_space<vmem>>, %arg6: memref<1x1x128xf32, #tpu.memory_space<vmem>>) attributes {dimension_semantics = [#tpu.dimension_semantics<parallel>], iteration_bounds = array<i64: 1>, scalar_prefetch = 0 : i64, scratch_operands = 0 : i64, tpu.core_type = #tpu.core_type<tc>, window_params = [{transform_indices = @transform_0, window_bounds = array<i64: 128, 16>}, {pipeline_mode = #tpu.pipeline_mode<synchronous>, transform_indices = @transform_1, window_bounds = array<i64: 16, 128>}, {pipeline_mode = #tpu.pipeline_mode<synchronous>, transform_indices = @transform_2, window_bounds = array<i64: 1, 128>}, {pipeline_mode = #tpu.pipeline_mode<synchronous>, transform_indices = @transform_3, window_bounds = array<i64: 128, 128>}, {pipeline_mode = #tpu.pipeline_mode<synchronous>, transform_indices = @transform_4, window_bounds = array<i64: 1, 128>}, {transform_indices = @transform_5, window_bounds = array<i64: 1, 1, 128>}]} {
    %c0 = arith.constant 0 : index
    %c0_0 = arith.constant 0 : index
    %0 = vector.load %arg1[%c0, %c0_0] : memref<128x16xf32, #tpu.memory_space<vmem>>, vector<128x16xf32>
    %1 = arith.truncf %0 : vector<128x16xf32> to vector<128x16xbf16>
    %c0_1 = arith.constant 0 : index
    %c0_2 = arith.constant 0 : index
    %2 = vector.load %arg2[%c0_1, %c0_2] : memref<16x128xbf16, #tpu.memory_space<vmem>>, vector<16x128xbf16>
    %cst = arith.constant dense<0.000000e+00> : vector<128x128xf32>
    %3 = tpu.matmul %1, %2, %cst {dimension_numbers = #tpu.dot_dimension_numbers<[1], [0], [0], [1], [0, 0, 1, 1], [], []>} : vector<128x16xbf16>, vector<16x128xbf16>, vector<128x128xf32> -> vector<128x128xf32>
    %c0_3 = arith.constant 0 : index
    %c0_4 = arith.constant 0 : index
    %4 = vector.load %arg3[%c0_3, %c0_4] : memref<1x128xf32, #tpu.memory_space<vmem>>, vector<1x128xf32>
    %5 = vector.broadcast %4 : vector<1x128xf32> to vector<128x128xf32>
    %6 = arith.addf %3, %5 : vector<128x128xf32>
    %cst_5 = arith.constant 0.000000e+00 : f32
    %7 = vector.broadcast %cst_5 : f32 to vector<128x128xf32>
    %8 = arith.maximumf %6, %7 : vector<128x128xf32>
    %9 = arith.truncf %8 : vector<128x128xf32> to vector<128x128xbf16>
    %c0_6 = arith.constant 0 : index
    %c0_7 = arith.constant 0 : index
    %10 = vector.load %arg4[%c0_6, %c0_7] : memref<128x128xbf16, #tpu.memory_space<vmem>>, vector<128x128xbf16>
    %cst_8 = arith.constant dense<0.000000e+00> : vector<128x128xf32>
    %11 = tpu.matmul %9, %10, %cst_8 {dimension_numbers = #tpu.dot_dimension_numbers<[1], [0], [0], [1], [0, 0, 1, 1], [], []>} : vector<128x128xbf16>, vector<128x128xbf16>, vector<128x128xf32> -> vector<128x128xf32>
    %12 = vector.shape_cast %11 : vector<128x128xf32> to vector<1x128x128xf32>
    %13 = tpu.transpose %12, [0, 2, 1] : vector<1x128x128xf32> -> vector<1x128x128xf32>
    %14 = vector.extract_strided_slice %13 {offsets = [0, 0, 0], sizes = [1, 1, 128], strides = [1, 1, 1]} : vector<1x128x128xf32> to vector<1x1x128xf32>
    %15 = vector.shape_cast %14 : vector<1x1x128xf32> to vector<1x128xf32>
    %c0_9 = arith.constant 0 : index
    %c0_10 = arith.constant 0 : index
    %16 = vector.load %arg5[%c0_9, %c0_10] : memref<1x128xf32, #tpu.memory_space<vmem>>, vector<1x128xf32>
    %17 = arith.addf %15, %16 : vector<1x128xf32>
    %18 = vector.shape_cast %17 : vector<1x128xf32> to vector<1x1x128xf32>
    %c0_11 = arith.constant 0 : index
    %c0_12 = arith.constant 0 : index
    %c0_13 = arith.constant 0 : index
    %19 = vector.load %arg6[%c0_11, %c0_12, %c0_13] : memref<1x1x128xf32, #tpu.memory_space<vmem>>, vector<1x1x128xf32>
    tpu.vector_store %arg6[%c0_11, %c0_12, %c0_13], %18 {strides = array<i32>} : memref<1x1x128xf32, #tpu.memory_space<vmem>>, vector<1x1x128xf32>,
    return
  }
  func.func @transform_0(%arg0: i32) -> (i32, i32) {
    %c0_i32 = arith.constant 0 : i32
    %c0_i32_0 = arith.constant 0 : i32
    return %arg0, %c0_i32 : i32, i32
  }
  func.func @transform_1(%arg0: i32) -> (i32, i32) {
    %c0_i32 = arith.constant 0 : i32
    %c0_i32_0 = arith.constant 0 : i32
    %c0_i32_1 = arith.constant 0 : i32
    return %c0_i32, %c0_i32_0 : i32, i32
  }
  func.func @transform_2(%arg0: i32) -> (i32, i32) {
    %c0_i32 = arith.constant 0 : i32
    %c0_i32_0 = arith.constant 0 : i32
    %c0_i32_1 = arith.constant 0 : i32
    return %c0_i32, %c0_i32_0 : i32, i32
  }
  func.func @transform_3(%arg0: i32) -> (i32, i32) {
    %c0_i32 = arith.constant 0 : i32
    %c0_i32_0 = arith.constant 0 : i32
    %c0_i32_1 = arith.constant 0 : i32
    return %c0_i32, %c0_i32_0 : i32, i32
  }
  func.func @transform_4(%arg0: i32) -> (i32, i32) {
    %c0_i32 = arith.constant 0 : i32
    %c0_i32_0 = arith.constant 0 : i32
    %c0_i32_1 = arith.constant 0 : i32
    return %c0_i32, %c0_i32_0 : i32, i32
  }
  func.func @transform_5(%arg0: i32) -> (i32, i32, i32) {
    %c0_i32 = arith.constant 0 : i32
    %c0_i32_0 = arith.constant 0 : i32
    %c0_i32_1 = arith.constant 0 : i32
    return %arg0, %c0_i32, %c0_i32_0 : i32, i32, i32
  }
}

</mosaic_0001>

<llo_original>
// kernel: mlp_forward.1
$region0: #{mlp_forward.1}
  #allocation0 [shape = 'u32[]', space=smem, size = 0x4, offset = 0x4, fixed_abs, tag = 'smem constant byte address 0x4 - core index']
  #allocation1 [shape = 'u32[72,128]{1,0:T(1,128)}', space=vmem, size = 0x9000, scoped, tag = 'internal scratch']
  %s0 = inlined_call_operand.vmem [shape: f32[128,16], index: 0, kind: input, shape index: {}]
  %s1 = inlined_call_operand.vmem [shape: bf16[16,128], index: 1, kind: input, shape index: {}]
  %s2 = inlined_call_operand.vmem [shape: f32[1,128], index: 2, kind: input, shape index: {}]
  %s3 = inlined_call_operand.vmem [shape: bf16[128,128], index: 3, kind: input, shape index: {}]
  %s4 = inlined_call_operand.vmem [shape: f32[1,128], index: 4, kind: input, shape index: {}]
  %s5 = inlined_call_operand.vmem [shape: f32[1,1,128], index: 5, kind: output, shape index: {}]
  %s6 = sld [smem:[#allocation0]]
  $region30: #{mlp_forward.1} parent=0
    _
  %s8 = ssub.s32 1, %s6
  %s9 = scalar_select 0, %s8, %s6
  // Predicated region
  $region2: #{mlp_forward.1} parent=0 // pred_check
    _
  $region3: #{mlp_forward.1} parent=0 // pred_check_branch
    %11 = sbr.rel (0) target = $region5
  $region4: #{mlp_forward.1} parent=0 // pred_region
    _
  $region5: #{mlp_forward.1} parent=0 // pred_fallthru
    _
  // Predicated region
  $region6: #{mlp_forward.1} parent=0 // pred_check
    _
  $region7: #{mlp_forward.1} parent=0 // pred_check_branch
    %13 = sbr.rel (0) target = $region9
  $region8: #{mlp_forward.1} parent=0 // pred_region
    _
  $region9: #{mlp_forward.1} parent=0 // pred_fallthru
    _
  // Predicated region
  $region10: #{mlp_forward.1} parent=0 // pred_check
    _
  $region11: #{mlp_forward.1} parent=0 // pred_check_branch
    %15 = sbr.rel (0) target = $region13
  $region12: #{mlp_forward.1} parent=0 // pred_region
    _
  $region13: #{mlp_forward.1} parent=0 // pred_fallthru
    _
  // Predicated region
  $region14: #{mlp_forward.1} parent=0 // pred_check
    _
  $region15: #{mlp_forward.1} parent=0 // pred_check_branch
    %17 = sbr.rel (0) target = $region17
  $region16: #{mlp_forward.1} parent=0 // pred_region
    _
  $region17: #{mlp_forward.1} parent=0 // pred_fallthru
    _
  // Predicated region
  $region18: #{mlp_forward.1} parent=0 // pred_check
    _
  $region19: #{mlp_forward.1} parent=0 // pred_check_branch
    %19 = sbr.rel (0) target = $region21
  $region20: #{mlp_forward.1} parent=0 // pred_region
    _
  $region21: #{mlp_forward.1} parent=0 // pred_fallthru
    _
  %v21 = vld [vmem:[%s0] sm:$0xff]
  %v22 = vld [vmem:[%s0 + $0x8] sm:$0xff]
  %v23 = vld [vmem:[%s0 + $0x10] sm:$0xff]
  %v24 = vld [vmem:[%s0 + $0x18] sm:$0xff]
  %v25 = vld [vmem:[%s0 + $0x20] sm:$0xff]
  %v26 = vld [vmem:[%s0 + $0x28] sm:$0xff]
  %v27 = vld [vmem:[%s0 + $0x30] sm:$0xff]
  %v28 = vld [vmem:[%s0 + $0x38] sm:$0xff]
  %v29 = vld [vmem:[%s0 + $0x40] sm:$0xff]
  %v30 = vld [vmem:[%s0 + $0x48] sm:$0xff]
  %v31 = vld [vmem:[%s0 + $0x50] sm:$0xff]
  %v32 = vld [vmem:[%s0 + $0x58] sm:$0xff]
  %v33 = vld [vmem:[%s0 + $0x60] sm:$0xff]
  %v34 = vld [vmem:[%s0 + $0x68] sm:$0xff]
  %v35 = vld [vmem:[%s0 + $0x70] sm:$0xff]
  %v36 = vld [vmem:[%s0 + $0x78] sm:$0xff]
  %v37 = vpack.c.bf16 %v22, %v21
  %v38 = vpack.c.bf16 %v24, %v23
  %v39 = vpack.c.bf16 %v26, %v25
  %v40 = vpack.c.bf16 %v28, %v27
  %v41 = vpack.c.bf16 %v30, %v29
  %v42 = vpack.c.bf16 %v32, %v31
  %v43 = vpack.c.bf16 %v34, %v33
  %v44 = vpack.c.bf16 %v36, %v35
  %v45 = vld [vmem:[%s1] sm:$0xf]
  %v46 = vld [vmem:[%s1 + $0x4] sm:$0xf]
  %v47 = vld [vmem:[%s2] sm:$0x1]
  %v49 = vperm.slane %v47, 0
  %v53 = vunpack.c.l.b16 %v45
  %v54 = vunpack.c.l.b16 %v46
  %v55 = vpack.c.b16 %v54, %v53
  %vm57 = vcmask 130048
  %v59 = vsel %vm57, %v37, 0
  %v62 = vsel %vm57, %v38, 0
  %v65 = vsel %vm57, %v39, 0
  %v68 = vsel %vm57, %v40, 0
  %v71 = vsel %vm57, %v41, 0
  %v74 = vsel %vm57, %v42, 0
  %v77 = vsel %vm57, %v43, 0
  %v80 = vsel %vm57, %v44, 0
  %82 = vmatpush.bf16.msra.mxu0 0
  %83 = vmatpush.bf16.msra.mxu0 0
  %84 = vmatpush.bf16.msra.mxu0 0
  %85 = vmatpush.bf16.msra.mxu0 0
  %86 = vmatpush.bf16.msra.mxu0 0
  %87 = vmatpush.bf16.msra.mxu0 0
  %88 = vmatpush.bf16.msra.mxu0 0
  %89 = vmatpush.bf16.msra.mxu0 %v55
  %90 = vmatmul.bf16.gmra.mxu0 %v59
  %v91 = vpop.f32.mrf.mxu0
  %v92 = vadd.f32 %v49, %v91
  %v93 = vpop.f32.mrf.mxu0
  %v94 = vadd.f32 %v49, %v93
  %95 = vmatmul.bf16.gmra.mxu0 %v62
  %v96 = vpop.f32.mrf.mxu0
  %v97 = vadd.f32 %v49, %v96
  %v98 = vpop.f32.mrf.mxu0
  %v99 = vadd.f32 %v49, %v98
  %100 = vmatmul.bf16.gmra.mxu0 %v65
  %v101 = vpop.f32.mrf.mxu0
  %v102 = vadd.f32 %v49, %v101
  %v103 = vpop.f32.mrf.mxu0
  %v104 = vadd.f32 %v49, %v103
  %105 = vmatmul.bf16.gmra.mxu0 %v68
  %v106 = vpop.f32.mrf.mxu0
  %v107 = vadd.f32 %v49, %v106
  %v108 = vpop.f32.mrf.mxu0
  %v109 = vadd.f32 %v49, %v108
  %110 = vmatmul.bf16.gmra.mxu0 %v71
  %v111 = vpop.f32.mrf.mxu0
  %v112 = vadd.f32 %v49, %v111
  %v113 = vpop.f32.mrf.mxu0
  %v114 = vadd.f32 %v49, %v113
  %115 = vmatmul.bf16.gmra.mxu0 %v74
  %v116 = vpop.f32.mrf.mxu0
  %v117 = vadd.f32 %v49, %v116
  %v118 = vpop.f32.mrf.mxu0
  %v119 = vadd.f32 %v49, %v118
  %120 = vmatmul.bf16.gmra.mxu0 %v77
  %v121 = vpop.f32.mrf.mxu0
  %v122 = vadd.f32 %v49, %v121
  %v123 = vpop.f32.mrf.mxu0
  %v124 = vadd.f32 %v49, %v123
  %125 = vmatmul.bf16.gmra.mxu0 %v80
  %v126 = vpop.f32.mrf.mxu0
  %v127 = vadd.f32 %v49, %v126
  %v128 = vpop.f32.mrf.mxu0
  %v129 = vadd.f32 %v49, %v128
  %130 = vdwg.mxu0
  %v131 = vmax.f32 %v92, 0.0
  %v132 = vmax.f32 %v94, 0.0
  %v133 = vmax.f32 %v97, 0.0
  %v134 = vmax.f32 %v99, 0.0
  %v135 = vmax.f32 %v102, 0.0
  %v136 = vmax.f32 %v104, 0.0
  %v137 = vmax.f32 %v107, 0.0
  %v138 = vmax.f32 %v109, 0.0
  %v139 = vmax.f32 %v112, 0.0
  %v140 = vmax.f32 %v114, 0.0
  %v141 = vmax.f32 %v117, 0.0
  %v142 = vmax.f32 %v119, 0.0
  %v143 = vmax.f32 %v122, 0.0
  %v144 = vmax.f32 %v124, 0.0
  %v145 = vmax.f32 %v127, 0.0
  %v146 = vmax.f32 %v129, 0.0
  %v147 = vpack.c.bf16 %v132, %v131
  %v148 = vpack.c.bf16 %v134, %v133
  %v149 = vpack.c.bf16 %v136, %v135
  %v150 = vpack.c.bf16 %v138, %v137
  %v151 = vpack.c.bf16 %v140, %v139
  %v152 = vpack.c.bf16 %v142, %v141
  %v153 = vpack.c.bf16 %v144, %v143
  %v154 = vpack.c.bf16 %v146, %v145
  %v155 = vld [vmem:[%s3] sm:$0xf]
  %v156 = vld [vmem:[%s3 + $0x4] sm:$0xf]
  %v157 = vld [vmem:[%s3 + $0x8] sm:$0xf]
  %v158 = vld [vmem:[%s3 + $0xc] sm:$0xf]
  %v159 = vld [vmem:[%s3 + $0x10] sm:$0xf]
  %v160 = vld [vmem:[%s3 + $0x14] sm:$0xf]
  %v161 = vld [vmem:[%s3 + $0x18] sm:$0xf]
  %v162 = vld [vmem:[%s3 + $0x1c] sm:$0xf]
  %v163 = vld [vmem:[%s3 + $0x20] sm:$0xf]
  %v164 = vld [vmem:[%s3 + $0x24] sm:$0xf]
  %v165 = vld [vmem:[%s3 + $0x28] sm:$0xf]
  %v166 = vld [vmem:[%s3 + $0x2c] sm:$0xf]
  %v167 = vld [vmem:[%s3 + $0x30] sm:$0xf]
  %v168 = vld [vmem:[%s3 + $0x34] sm:$0xf]
  %v169 = vld [vmem:[%s3 + $0x38] sm:$0xf]
  %v170 = vld [vmem:[%s3 + $0x3c] sm:$0xf]
  %v187 = vunpack.c.l.b16 %v155
  %v188 = vunpack.c.l.b16 %v156
  %v189 = vunpack.c.l.b16 %v157
  %v190 = vunpack.c.l.b16 %v158
  %v191 = vunpack.c.l.b16 %v159
  %v192 = vunpack.c.l.b16 %v160
  %v193 = vunpack.c.l.b16 %v161
  %v194 = vunpack.c.l.b16 %v162
  %v195 = vunpack.c.l.b16 %v163
  %v196 = vunpack.c.l.b16 %v164
  %v197 = vunpack.c.l.b16 %v165
  %v198 = vunpack.c.l.b16 %v166
  %v199 = vunpack.c.l.b16 %v167
  %v200 = vunpack.c.l.b16 %v168
  %v201 = vunpack.c.l.b16 %v169
  %v202 = vunpack.c.l.b16 %v170
  %v203 = vpack.c.b16 %v188, %v187
  %v204 = vpack.c.b16 %v190, %v189
  %v205 = vpack.c.b16 %v192, %v191
  %v206 = vpack.c.b16 %v194, %v193
  %v207 = vpack.c.b16 %v196, %v195
  %v208 = vpack.c.b16 %v198, %v197
  %v209 = vpack.c.b16 %v200, %v199
  %v210 = vpack.c.b16 %v202, %v201
  %219 = vmatpush.bf16.msra.mxu0 %v210
  %220 = vmatpush.bf16.msra.mxu0 %v209
  %221 = vmatpush.bf16.msra.mxu0 %v208
  %222 = vmatpush.bf16.msra.mxu0 %v207
  %223 = vmatpush.bf16.msra.mxu0 %v206
  %224 = vmatpush.bf16.msra.mxu0 %v205
  %225 = vmatpush.bf16.msra.mxu0 %v204
  %226 = vmatpush.bf16.msra.mxu0 %v203
  %227 = vmatmul.bf16.gmra.mxu0 %v147
  %v228 = vpop.f32.mrf.mxu0
  %v229 = vadd.f32 0.0, %v228
  %v230 = vpop.f32.mrf.mxu0
  %v231 = vadd.f32 0.0, %v230
  %232 = vmatmul.bf16.gmra.mxu0 %v148
  %v233 = vpop.f32.mrf.mxu0
  %v234 = vadd.f32 0.0, %v233
  %v235 = vpop.f32.mrf.mxu0
  %v236 = vadd.f32 0.0, %v235
  %237 = vmatmul.bf16.gmra.mxu0 %v149
  %v238 = vpop.f32.mrf.mxu0
  %v239 = vadd.f32 0.0, %v238
  %v240 = vpop.f32.mrf.mxu0
  %v241 = vadd.f32 0.0, %v240
  %242 = vmatmul.bf16.gmra.mxu0 %v150
  %v243 = vpop.f32.mrf.mxu0
  %v244 = vadd.f32 0.0, %v243
  %v245 = vpop.f32.mrf.mxu0
  %v246 = vadd.f32 0.0, %v245
  %247 = vmatmul.bf16.gmra.mxu0 %v151
  %v248 = vpop.f32.mrf.mxu0
  %v249 = vadd.f32 0.0, %v248
  %v250 = vpop.f32.mrf.mxu0
  %v251 = vadd.f32 0.0, %v250
  %252 = vmatmul.bf16.gmra.mxu0 %v152
  %v253 = vpop.f32.mrf.mxu0
  %v254 = vadd.f32 0.0, %v253
  %v255 = vpop.f32.mrf.mxu0
  %v256 = vadd.f32 0.0, %v255
  %257 = vmatmul.bf16.gmra.mxu0 %v153
  %v258 = vpop.f32.mrf.mxu0
  %v259 = vadd.f32 0.0, %v258
  %v260 = vpop.f32.mrf.mxu0
  %v261 = vadd.f32 0.0, %v260
  %262 = vmatmul.bf16.gmra.mxu0 %v154
  %v263 = vpop.f32.mrf.mxu0
  %v264 = vadd.f32 0.0, %v263
  %v265 = vpop.f32.mrf.mxu0
  %v266 = vadd.f32 0.0, %v265
  %267 = vdwg.mxu0
  %268 = vxpose.xlu0.b32.start [1/16] %v229, 128
  %269 = vxpose.xlu0.b32.cont [2/16] %v231, 128
  %270 = vxpose.xlu0.b32.cont [3/16] %v234, 128
  %271 = vxpose.xlu0.b32.cont [4/16] %v236, 128
  %272 = vxpose.xlu0.b32.cont [5/16] %v239, 128
  %273 = vxpose.xlu0.b32.cont [6/16] %v241, 128
  %274 = vxpose.xlu0.b32.cont [7/16] %v244, 128
  %275 = vxpose.xlu0.b32.cont [8/16] %v246, 128
  %276 = vxpose.xlu0.b32.cont [9/16] %v249, 128
  %277 = vxpose.xlu0.b32.cont [10/16] %v251, 128
  %278 = vxpose.xlu0.b32.cont [11/16] %v254, 128
  %279 = vxpose.xlu0.b32.cont [12/16] %v256, 128
  %280 = vxpose.xlu0.b32.cont [13/16] %v259, 128
  %281 = vxpose.xlu0.b32.cont [14/16] %v261, 128
  %282 = vxpose.xlu0.b32.cont [15/16] %v264, 128
  %283 = vxpose.xlu0.b32.end [16/16] %v266, 128
  %v284 = vpop.trf.xlu0
  %v285 = vpop.trf.xlu0
  %v286 = vpop.trf.xlu0
  %v287 = vpop.trf.xlu0
  %v288 = vpop.trf.xlu0
  %v289 = vpop.trf.xlu0
  %v290 = vpop.trf.xlu0
  %v291 = vpop.trf.xlu0
  %v292 = vpop.trf.xlu0
  %v293 = vpop.trf.xlu0
  %v294 = vpop.trf.xlu0
  %v295 = vpop.trf.xlu0
  %v296 = vpop.trf.xlu0
  %v297 = vpop.trf.xlu0
  %v298 = vpop.trf.xlu0
  %v299 = vpop.trf.xlu0
  %v300 = vld [vmem:[%s4] sm:$0x1]
  %v301 = vadd.f32 %v284, %v300
  %302 = vst [vmem:[%s5] sm:$0x1] %v301
  // Predicated region
  $region22: #{mlp_forward.1} parent=0 // pred_check
    _
  $region23: #{mlp_forward.1} parent=0 // pred_check_branch
    %304 = sbr.rel (0) target = $region25
  $region24: #{mlp_forward.1} parent=0 // pred_region
    _
  $region25: #{mlp_forward.1} parent=0 // pred_fallthru
    _
  // Predicated region
  $region26: #{mlp_forward.1} parent=0 // pred_check
    _
  $region27: #{mlp_forward.1} parent=0 // pred_check_branch
    %306 = sbr.rel (0) target = $region29
  $region28: #{mlp_forward.1} parent=0 // pred_region
    _
  $region29: #{mlp_forward.1} parent=0 // pred_fallthru
    _

</llo_original>
